<compile_context>
chip_gen: v7x
topology: tpu7x:2x2x1
jax: 0.10.0
libtpu: 0.0.40
codegen_flags: <defaults>
</compile_context>

<pallas_src>
import functools

import jax
import jax.numpy as jnp
from jax.experimental import pallas as pl
from jax.experimental.pallas import tpu as pltpu


def _round_up(x, m):
    return ((x + m - 1) // m) * m


def _label_smoothing_kernel(pred_ref, tgt_ref, out_ref, *,
                            smoothing, n_rows, n_classes, tile_n, tiles_per_core):
    p = pl.program_id(0)   # TensorCore shard
    i = pl.program_id(1)   # row-tile within the shard

    @pl.when(i == 0)
    def _():
        out_ref[...] = jnp.zeros_like(out_ref)

    x = pred_ref[...].astype(jnp.float32)              # (tile_n, C), native->f32
    tgt = tgt_ref[...]                                  # (tile_n, 1) int32
    tn, c = x.shape

    # Numerically-stable log-sum-exp over the class (lane) axis, relative to m.
    m = jnp.max(x, axis=-1, keepdims=True)                                   # (tn,1)
    sum_exp = jnp.sum(jnp.exp(x - m), axis=-1, keepdims=True)                # (tn,1)
    lse = jnp.log(sum_exp)                                                   # (tn,1)

    # log_prob[j] = x[j] - m - lse, hence (algebraic row sums, no extra full-tile
    # subtract/selects):
    #   nll    = -log_prob[target] = lse - (x[target] - m)
    #   smooth = -mean_j log_prob  = lse - (mean_j x[j] - m)
    col = jax.lax.broadcasted_iota(jnp.int32, (tn, c), 1)
    tgt_logit = jnp.sum(jnp.where(col == tgt, x, 0.0), axis=-1, keepdims=True)
    row_sum = jnp.sum(x, axis=-1, keepdims=True)

    nll = lse - (tgt_logit - m)
    smooth = lse - (row_sum * (1.0 / n_classes) - m)
    loss = (1.0 - smoothing) * nll + smoothing * smooth                      # (tn,1)

    # Mask rows past the true batch (ragged edge block / clamped duplicate tile).
    # Keep this a select (not a multiply): OOB rows may contain garbage/NaN.
    t = p * tiles_per_core + i
    row = t * tile_n + jax.lax.broadcasted_iota(jnp.int32, (tn, 1), 0)
    loss = jnp.where(row < n_rows, loss, 0.0)

    # TODO(synk): for extremely large N (>~10M rows) widen this to a small VMEM
    # vector accumulator (reduced once at the end) to shave a few ULPs.
    out_ref[...] += jnp.sum(loss, axis=0, keepdims=True)


def label_smoothing_loss(pred, target, smoothing=0.1, max_tile_n=None):
    """pred: (N, C) float (any dtype), target: (N,) int. Returns scalar f32 loss."""
    n, c = pred.shape
    itemsize = jnp.dtype(pred.dtype).itemsize
    c_vmem = max(128, _round_up(c, 128))          # lane-padded width in VMEM
    row_align = max(8, 32 // itemsize)            # sublane packing for the dtype

    # Generation-aware VMEM budget (v5e/v6e: 128 MiB, v7x: 64 MiB per TC).
    try:
        vmem_cap = int(pltpu.get_tpu_info().vmem_capacity_bytes)
    except Exception:  # pragma: no cover - conservative fallback (v7x-sized)
        vmem_cap = 64 * 1024 * 1024

    # Per-row VMEM bytes: double-buffered pred + target tiles (target is lane-
    # padded to 128 in VMEM) plus headroom for ~4 full-tile f32 temporaries.
    per_row = 2 * (c_vmem * itemsize + 128 * 4) + 4 * c_vmem * 4
    budget = (vmem_cap * 13) // 20                # ~65% of this chip's VMEM
    tile_n = max(row_align, (budget // per_row) // row_align * row_align)
    if max_tile_n is not None:
        tile_n = max(row_align, min(tile_n, (int(max_tile_n) // row_align) * row_align))
    tile_n = min(tile_n, _round_up(max(n, row_align), row_align))

    n_tiles = pl.cdiv(n, tile_n)
    num_cores = min(2, n_tiles)                   # batch shard across TCs (v7x)
    tiles_per_core = pl.cdiv(n_tiles, num_cores)

    tgt2d = target.astype(jnp.int32).reshape(n, 1)

    # Clamp the tile index so a shard's trailing steps never issue a fully
    # out-of-bounds DMA; the in-kernel row mask zeroes those rows anyway.
    def in_map(p_, i_):
        t = jnp.minimum(p_ * tiles_per_core + i_, n_tiles - 1)
        return (t, 0)

    kernel = functools.partial(
        _label_smoothing_kernel,
        smoothing=float(smoothing), n_rows=n, n_classes=c,
        tile_n=tile_n, tiles_per_core=tiles_per_core)

    cost = pl.CostEstimate(
        flops=6 * n * c,
        transcendentals=n * c,
        bytes_accessed=n * c * itemsize + n * 4 + num_cores * 4,
    )

    out = pl.pallas_call(
        kernel,
        out_shape=jax.ShapeDtypeStruct((num_cores, 1), jnp.float32),
        grid=(num_cores, tiles_per_core),
        in_specs=[
            pl.BlockSpec((tile_n, c), in_map),      # pred tiles, full class dim
            pl.BlockSpec((tile_n, 1), in_map),      # target tiles
        ],
        # One VMEM-resident (1,1) accumulator block per TensorCore shard.
        out_specs=pl.BlockSpec((1, 1), lambda p_, i_: (p_, 0)),
        compiler_params=pltpu.CompilerParams(
            dimension_semantics=("parallel", "arbitrary"),
            vmem_limit_bytes=int(vmem_cap * 9) // 10,
        ),
        cost_estimate=cost,
    )(pred, tgt2d)

    # Cross-shard reduction + mean over the true batch, in the JAX wrapper.
    return jnp.sum(out) / jnp.float32(n)


def _reference(pred, target, smoothing=0.1):
    confidence = 1.0 - smoothing
    log_prob = jax.nn.log_softmax(pred.astype(jnp.float32), axis=-1)
    nll = -jnp.take_along_axis(log_prob, target[:, None], axis=-1)[:, 0]
    smooth = -jnp.mean(log_prob, axis=-1)
    return jnp.mean(confidence * nll + smoothing * smooth)


if __name__ == "__main__":
    key = jax.random.PRNGKey(0)
    k1, k2, k3, k4, k5, k6 = jax.random.split(key, 6)

    # Case 1: small shape consistent with the module (batch=8, classes=32).
    N, C = 8, 32
    pred = jax.random.normal(k1, (N, C), dtype=jnp.float32)
    target = jax.random.randint(k2, (N,), 0, C, dtype=jnp.int32)
    loss = label_smoothing_loss(pred, target, smoothing=0.1)
    jax.block_until_ready(loss)
    ref = _reference(pred, target, smoothing=0.1)
    assert jnp.allclose(loss, ref, atol=1e-5, rtol=1e-5), (loss, ref)

    # Case 2: unaligned N and C, forced small tile -> multiple tiles per shard,
    # ragged edge block, clamped duplicate tile, dual-accumulator reduction.
    N2, C2 = 300, 200
    pred2 = jax.random.normal(k3, (N2, C2), dtype=jnp.float32)
    target2 = jax.random.randint(k4, (N2,), 0, C2, dtype=jnp.int32)
    loss2 = label_smoothing_loss(pred2, target2, smoothing=0.2, max_tile_n=64)
    jax.block_until_ready(loss2)
    ref2 = _reference(pred2, target2, smoothing=0.2)
    assert jnp.allclose(loss2, ref2, atol=1e-5, rtol=1e-5), (loss2, ref2)

    # Case 3: native bf16 inputs, non-128-multiple class dim (no host pad).
    N3, C3 = 64, 130
    pred3 = jax.random.normal(k5, (N3, C3), dtype=jnp.float32).astype(jnp.bfloat16)
    target3 = jax.random.randint(k6, (N3,), 0, C3, dtype=jnp.int32)
    loss3 = label_smoothing_loss(pred3, target3, smoothing=0.1)
    jax.block_until_ready(loss3)
    ref3 = _reference(pred3, target3, smoothing=0.1)
    assert jnp.allclose(loss3, ref3, atol=1e-3, rtol=1e-3), (loss3, ref3)

    print("KERNEL_OK")
</pallas_src>

<mosaic_0001>
module attributes {stable_mosaic.version = 11 : i64} {
  func.func @_label_smoothing_kernel(%arg0: i32, %arg1: i32, %arg2: memref<8x32xf32, #tpu.memory_space<vmem>>, %arg3: memref<8x1xi32, #tpu.memory_space<vmem>>, %arg4: memref<1x1xf32, #tpu.memory_space<vmem>>) attributes {dimension_semantics = [#tpu.dimension_semantics<parallel>, #tpu.dimension_semantics<arbitrary>], iteration_bounds = array<i64: 1, 1>, scalar_prefetch = 0 : i64, scratch_operands = 0 : i64, tpu.core_type = #tpu.core_type<tc>, window_params = [{transform_indices = @transform_0, window_bounds = array<i64: 8, 32>}, {transform_indices = @transform_1, window_bounds = array<i64: 8, 1>}, {transform_indices = @transform_2, window_bounds = array<i64: 1, 1>}]} {
    %c0_i32 = arith.constant 0 : i32
    %0 = arith.cmpi eq, %arg1, %c0_i32 : i32
    %1 = arith.extui %0 : i1 to i32
    %c0_i32_0 = arith.constant 0 : i32
    %2 = arith.cmpi ne, %1, %c0_i32_0 : i32
    scf.if %2 {
      %cst_18 = arith.constant 0.000000e+00 : f32
      %48 = vector.broadcast %cst_18 : f32 to vector<1x1xf32>
      %c0_19 = arith.constant 0 : index
      %c0_20 = arith.constant 0 : index
      %49 = vector.load %arg4[%c0_19, %c0_20] : memref<1x1xf32, #tpu.memory_space<vmem>>, vector<1x1xf32>
      tpu.vector_store %arg4[%c0_19, %c0_20], %48 {strides = array<i32>} : memref<1x1xf32, #tpu.memory_space<vmem>>, vector<1x1xf32>,
    } else {
    }
    %c0 = arith.constant 0 : index
    %c0_1 = arith.constant 0 : index
    %3 = vector.load %arg2[%c0, %c0_1] : memref<8x32xf32, #tpu.memory_space<vmem>>, vector<8x32xf32>
    %c0_2 = arith.constant 0 : index
    %c0_3 = arith.constant 0 : index
    %4 = vector.load %arg3[%c0_2, %c0_3] : memref<8x1xi32, #tpu.memory_space<vmem>>, vector<8x1xi32>
    %cst = arith.constant dense<0xFF800000> : vector<8xf32>
    %5 = vector.multi_reduction <maximumf>, %3, %cst [1] : vector<8x32xf32> to vector<8xf32>
    %6 = vector.shape_cast %5 : vector<8xf32> to vector<8x1xf32>
    %7 = vector.broadcast %6 : vector<8x1xf32> to vector<8x32xf32>
    %8 = arith.subf %3, %7 : vector<8x32xf32>
    %9 = math.exp %8 : vector<8x32xf32>
    %cst_4 = arith.constant dense<0.000000e+00> : vector<8xf32>
    %10 = vector.multi_reduction <add>, %9, %cst_4 [1] : vector<8x32xf32> to vector<8xf32>
    %11 = vector.shape_cast %10 : vector<8xf32> to vector<8x1xf32>
    %12 = math.log %11 : vector<8x1xf32>
    %13 = tpu.iota {dimensions = array<i32: 1>} : vector<8x32xi32>
    %14 = vector.broadcast %4 : vector<8x1xi32> to vector<8x32xi32>
    %15 = arith.cmpi eq, %13, %14 : vector<8x32xi32>
    %cst_5 = arith.constant 0.000000e+00 : f32
    %16 = vector.broadcast %cst_5 : f32 to vector<8x32xf32>
    %17 = arith.select %15, %3, %16 : vector<8x32xi1>, vector<8x32xf32>
    %cst_6 = arith.constant dense<0.000000e+00> : vector<8xf32>
    %18 = vector.multi_reduction <add>, %17, %cst_6 [1] : vector<8x32xf32> to vector<8xf32>
    %19 = vector.shape_cast %18 : vector<8xf32> to vector<8x1xf32>
    %cst_7 = arith.constant dense<0.000000e+00> : vector<8xf32>
    %20 = vector.multi_reduction <add>, %3, %cst_7 [1] : vector<8x32xf32> to vector<8xf32>
    %21 = vector.shape_cast %20 : vector<8xf32> to vector<8x1xf32>
    %22 = arith.subf %19, %6 : vector<8x1xf32>
    %23 = arith.subf %12, %22 : vector<8x1xf32>
    %cst_8 = arith.constant 3.125000e-02 : f32
    %24 = vector.broadcast %cst_8 : f32 to vector<8x1xf32>
    %25 = arith.mulf %21, %24 : vector<8x1xf32>
    %26 = arith.subf %25, %6 : vector<8x1xf32>
    %27 = arith.subf %12, %26 : vector<8x1xf32>
    %cst_9 = arith.constant 0.899999976 : f32
    %28 = vector.broadcast %cst_9 : f32 to vector<8x1xf32>
    %29 = arith.mulf %28, %23 : vector<8x1xf32>
    %cst_10 = arith.constant 1.000000e-01 : f32
    %30 = vector.broadcast %cst_10 : f32 to vector<8x1xf32>
    %31 = arith.mulf %30, %27 : vector<8x1xf32>
    %32 = arith.addf %29, %31 : vector<8x1xf32>
    %c1_i32 = arith.constant 1 : i32
    %33 = arith.muli %arg0, %c1_i32 : i32
    %34 = arith.addi %33, %arg1 : i32
    %c8_i32 = arith.constant 8 : i32
    %35 = arith.muli %34, %c8_i32 : i32
    %36 = tpu.iota {dimensions = array<i32: 0>} : vector<8x1xi32>
    %37 = vector.broadcast %35 : i32 to vector<8x1xi32>
    %38 = arith.addi %37, %36 : vector<8x1xi32>
    %c8_i32_11 = arith.constant 8 : i32
    %39 = vector.broadcast %c8_i32_11 : i32 to vector<8x1xi32>
    %40 = arith.cmpi slt, %38, %39 : vector<8x1xi32>
    %cst_12 = arith.constant 0.000000e+00 : f32
    %41 = vector.broadcast %cst_12 : f32 to vector<8x1xf32>
    %42 = arith.select %40, %32, %41 : vector<8x1xi1>, vector<8x1xf32>
    %c0_13 = arith.constant 0 : index
    %c0_14 = arith.constant 0 : index
    %43 = vector.load %arg4[%c0_13, %c0_14] : memref<1x1xf32, #tpu.memory_space<vmem>>, vector<1x1xf32>
    %cst_15 = arith.constant dense<0.000000e+00> : vector<1xf32>
    %44 = vector.multi_reduction <add>, %42, %cst_15 [0] : vector<8x1xf32> to vector<1xf32>
    %45 = vector.shape_cast %44 : vector<1xf32> to vector<1x1xf32>
    %46 = arith.addf %43, %45 : vector<1x1xf32>
    %c0_16 = arith.constant 0 : index
    %c0_17 = arith.constant 0 : index
    %47 = vector.load %arg4[%c0_16, %c0_17] : memref<1x1xf32, #tpu.memory_space<vmem>>, vector<1x1xf32>
    tpu.vector_store %arg4[%c0_16, %c0_17], %46 {strides = array<i32>} : memref<1x1xf32, #tpu.memory_space<vmem>>, vector<1x1xf32>,
    return
  }
  func.func @transform_0(%arg0: i32, %arg1: i32) -> (i32, i32) {
    %c1_i32 = arith.constant 1 : i32
    %0 = arith.muli %arg0, %c1_i32 : i32
    %1 = arith.addi %0, %arg1 : i32
    %c0_i32 = arith.constant 0 : i32
    %2 = arith.minsi %1, %c0_i32 : i32
    %c0_i32_0 = arith.constant 0 : i32
    %c0_i32_1 = arith.constant 0 : i32
    return %2, %c0_i32_0 : i32, i32
  }
  func.func @transform_1(%arg0: i32, %arg1: i32) -> (i32, i32) {
    %c1_i32 = arith.constant 1 : i32
    %0 = arith.muli %arg0, %c1_i32 : i32
    %1 = arith.addi %0, %arg1 : i32
    %c0_i32 = arith.constant 0 : i32
    %2 = arith.minsi %1, %c0_i32 : i32
    %c0_i32_0 = arith.constant 0 : i32
    %c0_i32_1 = arith.constant 0 : i32
    return %2, %c0_i32_0 : i32, i32
  }
  func.func @transform_2(%arg0: i32, %arg1: i32) -> (i32, i32) {
    %c0_i32 = arith.constant 0 : i32
    %c0_i32_0 = arith.constant 0 : i32
    return %arg0, %c0_i32 : i32, i32
  }
}

</mosaic_0001>

<llo_original>
// kernel: tpu_custom_call.1
$region0: #{tpu_custom_call.1}
  #allocation0 [shape = 'u32[]', space=smem, size = 0x4, offset = 0x4, fixed_abs, tag = 'smem constant byte address 0x4 - core index']
  #allocation1 [shape = 'u32[144,128]{1,0:T(1,128)}', space=vmem, size = 0x12000, scoped, tag = 'internal scratch']
  %s0 = inlined_call_operand.vmem [shape: f32[8,32], index: 0, kind: input, shape index: {}]
  %s1 = inlined_call_operand.vmem [shape: s32[8,1], index: 1, kind: input, shape index: {}]
  %s2 = inlined_call_operand.hbm [shape: f32[1,1], index: 2, kind: output, shape index: {}]
  %s3 = sld [smem:[#allocation0]]
  $region22: #{tpu_custom_call.1} parent=0
    _
  %s5 = ssub.s32 1, %s3
  %s6 = scalar_select 0, %s5, %s3
  $region1: #{tpu_custom_call.1} parent=0
    #allocation2 [shape = 'u8[512]{0}', space=vmem, size = 0x400, scoped, tag = 'output window, operand 0, single buffered']
    #allocation3 [shape = 's32[1]{0}', space=sflag, size = 0x4, scoped, tag = 'scoped memory for tpu_custom_call.1']
    %7 = vsyncpa [#allocation3], 0
    // Predicated region
    $region2: #{tpu_custom_call.1} parent=1 // pred_check
      _
    $region3: #{tpu_custom_call.1} parent=1 // pred_check_branch
      %9 = sbr.rel (0) target = $region5
    $region4: #{tpu_custom_call.1} parent=1 // pred_region
      %s10 = sadd.s32 0, 0
      %p11 = scmp.lt.s32.totalorder %s10, 0
      %s12 = scalar_select %p11, %s10, 0
      %p13 = scmp.lt.s32.totalorder %s12, 0
      %s14 = scalar_select %p13, %s12, 0
      %s15 = smul.addr %s14, 8
      %s16 = scalar_lea.vmem %s0, %s15
      %s17 = sadd.s32 0, 0
      %p18 = scmp.lt.s32.totalorder %s17, 0
      %s19 = scalar_select %p18, %s17, 0
    $region5: #{tpu_custom_call.1} parent=1 // pred_fallthru
      _
    // Predicated region
    $region6: #{tpu_custom_call.1} parent=1 // pred_check
      _
    $region7: #{tpu_custom_call.1} parent=1 // pred_check_branch
      %21 = sbr.rel (0) target = $region9
    $region8: #{tpu_custom_call.1} parent=1 // pred_region
      %s22 = sadd.s32 0, 0
      %p23 = scmp.lt.s32.totalorder %s22, 0
      %s24 = scalar_select %p23, %s22, 0
      %p25 = scmp.lt.s32.totalorder %s24, 0
      %s26 = scalar_select %p25, %s24, 0
      %s27 = smul.addr %s26, 8
      %s28 = scalar_lea.vmem %s1, %s27
      %s29 = sadd.s32 0, 0
      %p30 = scmp.lt.s32.totalorder %s29, 0
      %s31 = scalar_select %p30, %s29, 0
    $region9: #{tpu_custom_call.1} parent=1 // pred_fallthru
      _
    %s32 = sadd.s32 0, 0
    %p33 = scmp.lt.s32.totalorder %s32, 0
    %s34 = scalar_select %p33, %s32, 0
    %p35 = scmp.lt.s32.totalorder %s34, 0
    %s36 = scalar_select %p35, %s34, 0
    %s37 = smul.addr %s36, 8
    %s38 = scalar_lea.vmem %s0, %s37
    %s39 = sadd.s32 0, 0
    %p40 = scmp.lt.s32.totalorder %s39, 0
    %s41 = scalar_select %p40, %s39, 0
    %p42 = scmp.lt.s32.totalorder %s41, 0
    %s43 = scalar_select %p42, %s41, 0
    %s44 = smul.addr %s43, 8
    %s45 = scalar_lea.vmem %s1, %s44
    %s46 = sadd.s32 0, 0
    %p47 = scmp.lt.s32.totalorder %s46, 0
    %s48 = scalar_select %p47, %s46, 0
    %p49 = scmp.lt.s32.totalorder %s48, 0
    %s50 = scalar_select %p49, %s48, 0
    %s51 = smul.addr %s50, 8
    %s52 = scalar_lea.vmem %s0, %s51
    %s53 = sadd.s32 0, 0
    %p54 = scmp.lt.s32.totalorder %s53, 0
    %s55 = scalar_select %p54, %s53, 0
    %s56 = sadd.s32 0, 0
    %p57 = scmp.lt.s32.totalorder %s56, 0
    %s58 = scalar_select %p57, %s56, 0
    %p59 = scmp.lt.s32.totalorder %s58, 0
    %s60 = scalar_select %p59, %s58, 0
    %s61 = smul.addr %s60, 8
    %s62 = scalar_lea.vmem %s1, %s61
    %s63 = sadd.s32 0, 0
    %p64 = scmp.lt.s32.totalorder %s63, 0
    %s65 = scalar_select %p64, %s63, 0
    %p66 = scmp.eq.s32.totalorder 0, 0
    // Predicated region
    $region10: #{tpu_custom_call.1} parent=1 // pred_check
      %p67 = pneg %p66
    $region11: #{tpu_custom_call.1} parent=1 // pred_check_branch
      %69 = sbr.rel (%p67) target = $region13
    $region12: #{tpu_custom_call.1} parent=1 // pred_region
      %vm70 = vcmask 0
      %71 = vst.msk [vmem:[#allocation2] sm:$0x1] %vm70, 0.0
    $region13: #{tpu_custom_call.1} parent=1 // pred_fallthru
      _
    %v72 = vld [vmem:[%s52] sm:$0xff]
    %v73 = vld [vmem:[%s62] sm:$0xff]
    %vm74 = vcmask 261120
    %v75 = vsel %vm74, %v72, -inf
    %76 = vmax.xlane.f32.xlu0 %v75
    %v77 = vpop.xlane.xlu0 %76
    %v78 = vsub.f32 %v72, %v77
    %v79 = vmul.f32 %v78, 1.442695
    %v80 = vpow.pop %v79
    %v81 = vsel %vm74, %v80, 0.0
    %82 = vadd.xlane.f32.xlu0 %v81
    %v83 = vpop.xlane.xlu0 %82
    %v84 = vlog2.pop %v83
    %v85 = vmul.f32 %v84, 0.6931472
    %v86 = vlaneseq
    %v87 = vand.u32 %v86, 127
    %88 = vset.pattern.permute.xlu0 0
    %89 = vperm.xlu0 %88, %v73
    %v90 = vpop.permute.xlu0 %89
    %vm91 = vcmp.eq.s32.totalorder %v87, %v90
    %v92 = vsel %vm91, %v72, 0.0
    %v93 = vsel %vm74, %v92, 0.0
    %94 = vadd.xlane.f32.xlu0 %v93
    %v95 = vpop.xlane.xlu0 %94
    %v96 = vsel %vm74, %v72, 0.0
    %97 = vadd.xlane.f32.xlu0 %v96
    %v98 = vpop.xlane.xlu0 %97
    %v99 = vsub.f32 %v95, %v77
    %v100 = vsub.f32 %v85, %v99
    %v101 = vmul.f32 %v98, 0.03125
    %v102 = vsub.f32 %v101, %v77
    %v103 = vsub.f32 %v85, %v102
    %v104 = vmul.f32 %v100, 0.9
    %v105 = vmul.f32 %v103, 0.1
    %v106 = vadd.f32 %v104, %v105
    %s107 = sadd.s32 0, 0
    %s108 = smul.u32 %s107, 8
    %v109 = vlaneseq
    %v110 = vshrl.u32 %v109, 7
    %v111 = vstv %s108
    %v112 = vadd.s32 %v111, %v110
    %vm113 = vcmp.lt.s32.totalorder %v112, 8
    %v114 = vsel %vm113, %v106, 0.0
    %v115 = vld [vmem:[#allocation2] sm:$0x1]
    %v116 = vrot.slane %v114, 4
    %v117 = vadd.f32 %v114, %v116
    %v118 = vrot.slane %v117, 2
    %v119 = vadd.f32 %v117, %v118
    %v120 = vrot.slane %v119, 1
    %v121 = vadd.f32 %v119, %v120
    %v122 = vadd.f32 %v115, %v121
    %vm123 = vcmask 0
    %124 = vst.msk [vmem:[#allocation2] sm:$0x1] %vm123, %v122
    // Predicated region
    $region14: #{tpu_custom_call.1} parent=1 // pred_check
      _
    $region15: #{tpu_custom_call.1} parent=1 // pred_check_branch
      %126 = sbr.rel (0) target = $region17
    $region16: #{tpu_custom_call.1} parent=1 // pred_region
      %s128 = ssub.s32 16, 16
      %129 = vsyncadd [#allocation3], %s128
      %s131 = sshll.u32 [#allocation2], 4
      %s132 = int_to_ptr.vmem [resolvable:$true] %s131
      %134 = dma.vmem_to_hbm [thread:$0]  %s132, 16, %s2, [#allocation3]
    $region17: #{tpu_custom_call.1} parent=1 // pred_fallthru
      _
    // Predicated region
    $region18: #{tpu_custom_call.1} parent=1 // pred_check
      _
    $region19: #{tpu_custom_call.1} parent=1 // pred_check_branch
      %136 = sbr.rel (0) target = $region21
    $region20: #{tpu_custom_call.1} parent=1 // pred_region
      %137 = dma.done [#allocation3], 16
    $region21: #{tpu_custom_call.1} parent=1 // pred_fallthru
      _
    %138 = vsyncpa [#allocation3], 1

</llo_original>
